<compile_context>
chip_gen: v6e
topology: v6e:2x2x1
jax: 0.10.0
libtpu: 0.0.40
codegen_flags: <defaults>
</compile_context>

<pallas_src>
import jax
import jax.numpy as jnp
from jax.experimental import pallas as pl
from jax.experimental.pallas import tpu as pltpu


def _qembed_kernel(x_ref, low_ref, high_ref, emb_ref, o_ref):
    x = x_ref[...]          # (tile_n, 1)   f32
    low = low_ref[...]      # (1, n_bins)   f32, low[0]   = -inf
    high = high_ref[...]    # (1, n_bins)   f32, high[-1] = +inf
    # one_hot[i, j] = 1  iff  low[j] < x[i] <= high[j]  == torch.bucketize(right=False)
    one_hot = jnp.logical_and(x > low, x <= high).astype(jnp.float32)
    o_ref[...] = jnp.dot(
        one_hot,
        emb_ref[...].astype(jnp.float32),
        preferred_element_type=jnp.float32,
    ).astype(o_ref.dtype)


def make_bins(min_value, max_value, n_bins, method="linear", dtype=jnp.float32):
    """Boundary construction, mirroring QuantizationEmbedding.__init__."""
    assert method in ("log", "linear")
    if method == "log":
        bins = jnp.exp(jnp.linspace(jnp.log(min_value), jnp.log(max_value), n_bins - 1))
    else:
        bins = jnp.linspace(min_value, max_value, n_bins - 1)
    return bins.astype(dtype)


def quantization_embedding(x, bins, emb_table, *, tile_n=256):
    """Pallas-backed QuantizationEmbedding.forward.

    x:         any-shape float array of values to quantize
    bins:      (n_bins - 1,) sorted bucket boundaries
    emb_table: (n_bins, embed_dims) embedding weights
    returns:   x.shape + (embed_dims,)
    """
    n_bins, embed_dims = emb_table.shape
    assert bins.shape == (n_bins - 1,)

    orig_shape = x.shape
    xf = x.reshape(-1).astype(jnp.float32)
    n = xf.shape[0]

    # Row tile: sublane-aligned; pad the flattened length to a multiple of it.
    tile_n = max(8, (min(tile_n, max(n, 8)) // 8) * 8)
    n_pad = pl.cdiv(n, tile_n) * tile_n
    if n_pad != n:
        xf = jnp.pad(xf, (0, n_pad - n))
    x2d = xf.reshape(n_pad, 1)

    bins_f = bins.astype(jnp.float32)
    low = jnp.concatenate([jnp.full((1,), -jnp.inf, jnp.float32), bins_f])[None, :]
    high = jnp.concatenate([bins_f, jnp.full((1,), jnp.inf, jnp.float32)])[None, :]

    out_dtype = emb_table.dtype
    itemsize = jnp.dtype(out_dtype).itemsize
    grid = (n_pad // tile_n,)

    out2d = pl.pallas_call(
        _qembed_kernel,
        out_shape=jax.ShapeDtypeStruct((n_pad, embed_dims), out_dtype),
        grid_spec=pltpu.PrefetchScalarGridSpec(
            num_scalar_prefetch=0,
            grid=grid,
            in_specs=[
                pl.BlockSpec((tile_n, 1), lambda i: (i, 0)),            # x column
                pl.BlockSpec((1, n_bins), lambda i: (0, 0)),            # low edges
                pl.BlockSpec((1, n_bins), lambda i: (0, 0)),            # high edges
                pl.BlockSpec((n_bins, embed_dims), lambda i: (0, 0)),   # table (resident)
            ],
            out_specs=pl.BlockSpec((tile_n, embed_dims), lambda i: (i, 0)),
        ),
        compiler_params=pltpu.CompilerParams(
            dimension_semantics=("parallel",),
        ),
        cost_estimate=pl.CostEstimate(
            flops=2 * n_pad * n_bins * embed_dims,
            transcendentals=0,
            bytes_accessed=(
                n_pad * 4                          # x
                + 2 * n_bins * 4                   # low / high edges
                + n_bins * embed_dims * itemsize   # embedding table
                + n_pad * embed_dims * itemsize    # output
            ),
        ),
    )(x2d, low, high, emb_table)

    return out2d[:n].reshape(*orig_shape, embed_dims)


if __name__ == "__main__":
    key = jax.random.PRNGKey(0)
    k_emb, k_x = jax.random.split(key)

    # Small, module-consistent config: 256 bins, 128-dim (lane-dense) embeddings.
    min_value, max_value, n_bins, embed_dims = -4.0, 4.0, 256, 128
    bins = make_bins(min_value, max_value, n_bins, method="linear")
    emb_table = jax.random.normal(k_emb, (n_bins, embed_dims), dtype=jnp.float32)

    # Values to quantize (e.g. pitch / energy features).
    x = jax.random.normal(k_x, (2, 4, 16, 16), dtype=jnp.float32)

    y = quantization_embedding(x, bins, emb_table)
    jax.block_until_ready(y)

    # Pure-JAX reference: searchsorted(side='left') == torch.bucketize(right=False).
    idx_ref = jnp.searchsorted(bins, x.reshape(-1), side="left")
    y_ref = emb_table[idx_ref].reshape(*x.shape, embed_dims)

    assert y.shape == (*x.shape, embed_dims) and y.dtype == emb_table.dtype
    assert bool(jnp.allclose(y, y_ref, atol=1e-5, rtol=1e-5)), "mismatch vs reference"
    print("KERNEL_OK")
</pallas_src>

<mosaic_0001>
module attributes {stable_mosaic.version = 11 : i64} {
  func.func @_qembed_kernel(%arg0: i32, %arg1: memref<256x1xf32, #tpu.memory_space<vmem>>, %arg2: memref<1x256xf32, #tpu.memory_space<vmem>>, %arg3: memref<1x256xf32, #tpu.memory_space<vmem>>, %arg4: memref<256x128xf32, #tpu.memory_space<vmem>>, %arg5: memref<256x128xf32, #tpu.memory_space<vmem>>) attributes {dimension_semantics = [#tpu.dimension_semantics<parallel>], iteration_bounds = array<i64: 8>, scalar_prefetch = 0 : i64, scratch_operands = 0 : i64, tpu.core_type = #tpu.core_type<tc>, window_params = [{transform_indices = @transform_0, window_bounds = array<i64: 256, 1>}, {pipeline_mode = #tpu.pipeline_mode<synchronous>, transform_indices = @transform_1, window_bounds = array<i64: 1, 256>}, {pipeline_mode = #tpu.pipeline_mode<synchronous>, transform_indices = @transform_2, window_bounds = array<i64: 1, 256>}, {pipeline_mode = #tpu.pipeline_mode<synchronous>, transform_indices = @transform_3, window_bounds = array<i64: 256, 128>}, {transform_indices = @transform_4, window_bounds = array<i64: 256, 128>}]} {
    %c0 = arith.constant 0 : index
    %c0_0 = arith.constant 0 : index
    %0 = vector.load %arg1[%c0, %c0_0] : memref<256x1xf32, #tpu.memory_space<vmem>>, vector<256x1xf32>
    %c0_1 = arith.constant 0 : index
    %c0_2 = arith.constant 0 : index
    %1 = vector.load %arg2[%c0_1, %c0_2] : memref<1x256xf32, #tpu.memory_space<vmem>>, vector<1x256xf32>
    %c0_3 = arith.constant 0 : index
    %c0_4 = arith.constant 0 : index
    %2 = vector.load %arg3[%c0_3, %c0_4] : memref<1x256xf32, #tpu.memory_space<vmem>>, vector<1x256xf32>
    %3 = vector.broadcast %0 : vector<256x1xf32> to vector<256x256xf32>
    %4 = vector.broadcast %1 : vector<1x256xf32> to vector<256x256xf32>
    %5 = arith.cmpf ogt, %3, %4 : vector<256x256xf32>
    %6 = vector.broadcast %0 : vector<256x1xf32> to vector<256x256xf32>
    %7 = vector.broadcast %2 : vector<1x256xf32> to vector<256x256xf32>
    %8 = arith.cmpf ole, %6, %7 : vector<256x256xf32>
    %9 = arith.andi %5, %8 : vector<256x256xi1>
    %10 = arith.extui %9 : vector<256x256xi1> to vector<256x256xi32>
    %11 = arith.sitofp %10 : vector<256x256xi32> to vector<256x256xf32>
    %c0_5 = arith.constant 0 : index
    %c0_6 = arith.constant 0 : index
    %12 = vector.load %arg4[%c0_5, %c0_6] : memref<256x128xf32, #tpu.memory_space<vmem>>, vector<256x128xf32>
    %cst = arith.constant dense<0.000000e+00> : vector<256x128xf32>
    %13 = tpu.matmul %11, %12, %cst {dimension_numbers = #tpu.dot_dimension_numbers<[1], [0], [0], [1], [0, 0, 1, 1], [], []>} : vector<256x256xf32>, vector<256x128xf32>, vector<256x128xf32> -> vector<256x128xf32>
    %c0_7 = arith.constant 0 : index
    %c0_8 = arith.constant 0 : index
    %14 = vector.load %arg5[%c0_7, %c0_8] : memref<256x128xf32, #tpu.memory_space<vmem>>, vector<256x128xf32>
    tpu.vector_store %arg5[%c0_7, %c0_8], %13 {strides = array<i32>} : memref<256x128xf32, #tpu.memory_space<vmem>>, vector<256x128xf32>,
    return
  }
  func.func @transform_0(%arg0: i32) -> (i32, i32) {
    %c0_i32 = arith.constant 0 : i32
    %c0_i32_0 = arith.constant 0 : i32
    return %arg0, %c0_i32 : i32, i32
  }
  func.func @transform_1(%arg0: i32) -> (i32, i32) {
    %c0_i32 = arith.constant 0 : i32
    %c0_i32_0 = arith.constant 0 : i32
    %c0_i32_1 = arith.constant 0 : i32
    return %c0_i32, %c0_i32_0 : i32, i32
  }
  func.func @transform_2(%arg0: i32) -> (i32, i32) {
    %c0_i32 = arith.constant 0 : i32
    %c0_i32_0 = arith.constant 0 : i32
    %c0_i32_1 = arith.constant 0 : i32
    return %c0_i32, %c0_i32_0 : i32, i32
  }
  func.func @transform_3(%arg0: i32) -> (i32, i32) {
    %c0_i32 = arith.constant 0 : i32
    %c0_i32_0 = arith.constant 0 : i32
    %c0_i32_1 = arith.constant 0 : i32
    return %c0_i32, %c0_i32_0 : i32, i32
  }
  func.func @transform_4(%arg0: i32) -> (i32, i32) {
    %c0_i32 = arith.constant 0 : i32
    %c0_i32_0 = arith.constant 0 : i32
    return %arg0, %c0_i32 : i32, i32
  }
}

</mosaic_0001>

<llo_original>
// kernel: tpu_custom_call.1
$region0: #{tpu_custom_call.1}
  #allocation0 [shape = 'u32[]', space=smem, size = 0x4, offset = 0x4, fixed_abs, tag = 'smem constant byte address 0x4 - core index']
  #allocation1 [shape = 'u32[144,128]{1,0:T(1,128)}', space=vmem, size = 0x12000, scoped, tag = 'internal scratch']
  %s0 = inlined_call_operand.vmem [shape: f32[2048,1], index: 0, kind: input, shape index: {}]
  %s1 = inlined_call_operand.vmem [shape: f32[1,256], index: 1, kind: input, shape index: {}]
  %s2 = inlined_call_operand.vmem [shape: f32[1,256], index: 2, kind: input, shape index: {}]
  %s3 = inlined_call_operand.vmem [shape: f32[256,128], index: 3, kind: input, shape index: {}]
  %s4 = inlined_call_operand.hbm [shape: f32[2048,128], index: 4, kind: output, shape index: {}]
  %s5 = sld [smem:[#allocation0]]
  $region49: #{tpu_custom_call.1} parent=0
    _
  %s7 = ssub.s32 1, %s5
  %s8 = scalar_select 0, %s7, %s5
  $region1: #{tpu_custom_call.1} parent=0
    #allocation2 [shape = 'u8[262144]{0}', space=vmem, size = 0x40000, scoped, tag = 'output window, operand 0']
    #allocation3 [shape = 's32[2]{0}', space=sflag, size = 0x8, scoped, tag = 'scoped memory for tpu_custom_call.1']
    %9 = vsyncpa [#allocation3], 0
    %s10 = scalar_lea.sflag [#allocation3], 1
    %11 = vsyncpa %s10, 0
    loop: start=0, step=1, limit=10
    $region2: #{tpu_custom_call.1} parent=1 // loop_pre_header
      _
    $region3: #{tpu_custom_call.1} parent=1 // loop_header
      %s13 = sphi 0, %s17
      %p14 = scmp.ge.s32.totalorder %s13, 10
      %s23 = sphi 0, %s25
      %s26 = sphi 0, %s23
      %s27 = sphi 0, %s26
      %s43 = sphi 0, %s27
      %s47 = sphi 0, %s47
      %s49 = sphi 0, %s47
      %s50 = sphi 0, %s49
      %s64 = sphi 0, %s50
      %s68 = sphi 0, %s68
      %s70 = sphi 0, %s68
      %s71 = sphi 0, %s70
      %s85 = sphi 0, %s71
      %s89 = sphi 0, %s89
      %s91 = sphi 0, %s89
      %s92 = sphi 0, %s91
      %s106 = sphi 0, %s92
      %s112 = sphi 0, %s114
      %s115 = sphi 0, %s112
      %s116 = sphi 0, %s115
      %s132 = sphi 0, %s116
    $region4: #{tpu_custom_call.1} parent=1 // loop_header_branch
      %16 = sbr.rel (%p14) target = $region8
    $region5: #{tpu_custom_call.1} parent=1 // loop_body
      %s18 = ssub.s32 %s13, 1
      %s19 = ssub.s32 %s13, 2
      %s20 = sadd.s32 %s13, 1
      %s21 = ssub.s32 %s13, %s20
      %p22 = scmp.eq.s32.totalorder %s21, 0
      %s24 = sadd.s32 %s23, 1
      %s25 = scalar_select %p22, %s23, %s24
      %p28 = pneg %p22
      %p29 = scmp.eq.s32.totalorder %s13, 7
      %p30 = por %p28, %p29
      %p31 = scmp.ne.s32.totalorder %s23, %s26
      %p32 = scmp.eq.s32.totalorder %s13, 0
      %p33 = por %p31, %p32
      %p34 = scmp.ne.s32.totalorder %s23, %s26
      %p35 = scmp.eq.s32.totalorder %s18, 7
      %p36 = por %p34, %p35
      %p37 = scmp.ne.s32.totalorder %s26, %s27
      %p38 = scmp.eq.s32.totalorder %s18, 0
      %p39 = por %p37, %p38
      %p40 = scmp.ne.s32.totalorder %s26, %s27
      %p41 = scmp.eq.s32.totalorder %s19, 7
      %p42 = por %p40, %p41
      %p44 = scmp.ne.s32.totalorder %s27, %s43
      %p45 = scmp.eq.s32.totalorder %s19, 0
      %p46 = por %p44, %p45
      %s48 = sadd.s32 %s47, 1
      %p51 = scmp.eq.s32.totalorder %s13, 7
      %p52 = scmp.ne.s32.totalorder %s47, %s49
      %p53 = scmp.eq.s32.totalorder %s13, 0
      %p54 = por %p52, %p53
      %p55 = scmp.ne.s32.totalorder %s47, %s49
      %p56 = scmp.eq.s32.totalorder %s18, 7
      %p57 = por %p55, %p56
      %p58 = scmp.ne.s32.totalorder %s49, %s50
      %p59 = scmp.eq.s32.totalorder %s18, 0
      %p60 = por %p58, %p59
      %p61 = scmp.ne.s32.totalorder %s49, %s50
      %p62 = scmp.eq.s32.totalorder %s19, 7
      %p63 = por %p61, %p62
      %p65 = scmp.ne.s32.totalorder %s50, %s64
      %p66 = scmp.eq.s32.totalorder %s19, 0
      %p67 = por %p65, %p66
      %s69 = sadd.s32 %s68, 1
      %p72 = scmp.eq.s32.totalorder %s13, 7
      %p73 = scmp.ne.s32.totalorder %s68, %s70
      %p74 = scmp.eq.s32.totalorder %s13, 0
      %p75 = por %p73, %p74
      %p76 = scmp.ne.s32.totalorder %s68, %s70
      %p77 = scmp.eq.s32.totalorder %s18, 7
      %p78 = por %p76, %p77
      %p79 = scmp.ne.s32.totalorder %s70, %s71
      %p80 = scmp.eq.s32.totalorder %s18, 0
      %p81 = por %p79, %p80
      %p82 = scmp.ne.s32.totalorder %s70, %s71
      %p83 = scmp.eq.s32.totalorder %s19, 7
      %p84 = por %p82, %p83
      %p86 = scmp.ne.s32.totalorder %s71, %s85
      %p87 = scmp.eq.s32.totalorder %s19, 0
      %p88 = por %p86, %p87
      %s90 = sadd.s32 %s89, 1
      %p93 = scmp.eq.s32.totalorder %s13, 7
      %p94 = scmp.ne.s32.totalorder %s89, %s91
      %p95 = scmp.eq.s32.totalorder %s13, 0
      %p96 = por %p94, %p95
      %p97 = scmp.ne.s32.totalorder %s89, %s91
      %p98 = scmp.eq.s32.totalorder %s18, 7
      %p99 = por %p97, %p98
      %p100 = scmp.ne.s32.totalorder %s91, %s92
      %p101 = scmp.eq.s32.totalorder %s18, 0
      %p102 = por %p100, %p101
      %p103 = scmp.ne.s32.totalorder %s91, %s92
      %p104 = scmp.eq.s32.totalorder %s19, 7
      %p105 = por %p103, %p104
      %p107 = scmp.ne.s32.totalorder %s92, %s106
      %p108 = scmp.eq.s32.totalorder %s19, 0
      %p109 = por %p107, %p108
      %s110 = ssub.s32 %s13, %s20
      %p111 = scmp.eq.s32.totalorder %s110, 0
      %s113 = sadd.s32 %s112, 1
      %s114 = scalar_select %p111, %s112, %s113
      %p117 = pneg %p111
      %p118 = scmp.eq.s32.totalorder %s13, 7
      %p119 = por %p117, %p118
      %p120 = scmp.ne.s32.totalorder %s112, %s115
      %p121 = scmp.eq.s32.totalorder %s13, 0
      %p122 = por %p120, %p121
      %p123 = scmp.ne.s32.totalorder %s112, %s115
      %p124 = scmp.eq.s32.totalorder %s18, 7
      %p125 = por %p123, %p124
      %p126 = scmp.ne.s32.totalorder %s115, %s116
      %p127 = scmp.eq.s32.totalorder %s18, 0
      %p128 = por %p126, %p127
      %p129 = scmp.ne.s32.totalorder %s115, %s116
      %p130 = scmp.eq.s32.totalorder %s19, 7
      %p131 = por %p129, %p130
      %p133 = scmp.ne.s32.totalorder %s116, %s132
      %p134 = scmp.eq.s32.totalorder %s19, 0
      %p135 = por %p133, %p134
      %p136 = scmp.le.s32.totalorder 1, %s13
      %p137 = scmp.lt.s32.totalorder %s13, 9
      %p138 = pnand %p136, %p137
      %p139 = pneg %p138
      // Predicated region
      $region9: #{tpu_custom_call.1} parent=5 // pred_check
        _
      $region10: #{tpu_custom_call.1} parent=5 // pred_check_branch
        %141 = sbr.rel (%p138) target = $region12
      $region11: #{tpu_custom_call.1} parent=5 // pred_region
        %s142 = ssub.s32 %s13, 1
        // Predicated region
        $region13: #{tpu_custom_call.1} parent=11 // pred_check
          %p143 = pneg %p60
        $region14: #{tpu_custom_call.1} parent=11 // pred_check_branch
          %145 = sbr.rel (%p143) target = $region16
        $region15: #{tpu_custom_call.1} parent=11 // pred_region
          _
        $region16: #{tpu_custom_call.1} parent=11 // pred_fallthru
          _
        // Predicated region
        $region17: #{tpu_custom_call.1} parent=11 // pred_check
          %p146 = pneg %p81
        $region18: #{tpu_custom_call.1} parent=11 // pred_check_branch
          %148 = sbr.rel (%p146) target = $region20
        $region19: #{tpu_custom_call.1} parent=11 // pred_region
          _
        $region20: #{tpu_custom_call.1} parent=11 // pred_fallthru
          _
        // Predicated region
        $region21: #{tpu_custom_call.1} parent=11 // pred_check
          %p149 = pneg %p102
        $region22: #{tpu_custom_call.1} parent=11 // pred_check_branch
          %151 = sbr.rel (%p149) target = $region24
        $region23: #{tpu_custom_call.1} parent=11 // pred_region
          _
        $region24: #{tpu_custom_call.1} parent=11 // pred_fallthru
          _
      $region12: #{tpu_custom_call.1} parent=5 // pred_fallthru
        _
      %p152 = scmp.lt.s32.totalorder %s13, 8
      // Predicated region
      $region25: #{tpu_custom_call.1} parent=5 // pred_check
        %p153 = pneg %p152
      $region26: #{tpu_custom_call.1} parent=5 // pred_check_branch
        %155 = sbr.rel (%p153) target = $region28
      $region27: #{tpu_custom_call.1} parent=5 // pred_region
        // Predicated region
        $region29: #{tpu_custom_call.1} parent=27 // pred_check
          %p156 = pneg %p33
        $region30: #{tpu_custom_call.1} parent=27 // pred_check_branch
          %158 = sbr.rel (%p156) target = $region32
        $region31: #{tpu_custom_call.1} parent=27 // pred_region
          %s159 = smul.u32 32, %s13
          %p160 = scmp.lt.s32.totalorder %s159, 255
          %s161 = scalar_select %p160, %s159, 255
          %s162 = smul.addr %s161, 8
          %s163 = scalar_lea.vmem %s0, %s162
          %s164 = smul.u32 32, %s13
        $region32: #{tpu_custom_call.1} parent=27 // pred_fallthru
          _
      $region28: #{tpu_custom_call.1} parent=5 // pred_fallthru
        _
      %p165 = scmp.le.s32.totalorder 1, %s13
      %p166 = scmp.lt.s32.totalorder %s13, 9
      %p167 = pnand %p165, %p166
      %p168 = pneg %p167
      // Predicated region
      $region33: #{tpu_custom_call.1} parent=5 // pred_check
        _
      $region34: #{tpu_custom_call.1} parent=5 // pred_check_branch
        %170 = sbr.rel (%p167) target = $region36
      $region35: #{tpu_custom_call.1} parent=5 // pred_region
        %s171 = ssub.s32 %s13, 1
        %s172 = smul.u32 32, %s18
        %p173 = scmp.lt.s32.totalorder %s172, 255
        %s174 = scalar_select %p173, %s172, 255
        %s175 = smul.addr %s174, 8
        %s176 = scalar_lea.vmem %s0, %s175
        %p177 = pneg %p39
        %p178 = pneg %p36
        %p179 = pneg %p60
        %p180 = pneg %p57
        %p181 = pneg %p81
        %p182 = pneg %p78
        %p183 = pneg %p102
        %p184 = pneg %p99
        %p185 = pneg %p128
        %p186 = pneg %p125
        %s187 = sand.u32 %s115, 1
        %s188 = scalar_lea.sflag [#allocation3], %s187
        %s189 = sand.u32 %s115, 1
        %s190 = smul.addr %s189, 256
        %s191 = scalar_lea.vmem [#allocation2], %s190
        %s192 = smul.u32 32, %s18
        %p193 = scmp.lt.s32.totalorder %s192, 255
        %s194 = scalar_select %p193, %s192, 255
        %s195 = smul.addr %s194, 8
        %s196 = scalar_lea.vmem %s0, %s195
        %s197 = smul.u32 32, %s18
        %s198 = smul.u32 32, %s18
        %v199 = vld [vmem:[%s196] sm:$0xff]
        %v200 = vld [vmem:[%s196 + $0x8] sm:$0xff]
        %v201 = vld [vmem:[%s196 + $0x10] sm:$0xff]
        %v202 = vld [vmem:[%s196 + $0x18] sm:$0xff]
        %v203 = vld [vmem:[%s196 + $0x20] sm:$0xff]
        %v204 = vld [vmem:[%s196 + $0x28] sm:$0xff]
        %v205 = vld [vmem:[%s196 + $0x30] sm:$0xff]
        %v206 = vld [vmem:[%s196 + $0x38] sm:$0xff]
        %v207 = vld [vmem:[%s196 + $0x40] sm:$0xff]
        %v208 = vld [vmem:[%s196 + $0x48] sm:$0xff]
        %v209 = vld [vmem:[%s196 + $0x50] sm:$0xff]
        %v210 = vld [vmem:[%s196 + $0x58] sm:$0xff]
        %v211 = vld [vmem:[%s196 + $0x60] sm:$0xff]
        %v212 = vld [vmem:[%s196 + $0x68] sm:$0xff]
        %v213 = vld [vmem:[%s196 + $0x70] sm:$0xff]
        %v214 = vld [vmem:[%s196 + $0x78] sm:$0xff]
        %v215 = vld [vmem:[%s196 + $0x80] sm:$0xff]
        %v216 = vld [vmem:[%s196 + $0x88] sm:$0xff]
        %v217 = vld [vmem:[%s196 + $0x90] sm:$0xff]
        %v218 = vld [vmem:[%s196 + $0x98] sm:$0xff]
        %v219 = vld [vmem:[%s196 + $0xa0] sm:$0xff]
        %v220 = vld [vmem:[%s196 + $0xa8] sm:$0xff]
        %v221 = vld [vmem:[%s196 + $0xb0] sm:$0xff]
        %v222 = vld [vmem:[%s196 + $0xb8] sm:$0xff]
        %v223 = vld [vmem:[%s196 + $0xc0] sm:$0xff]
        %v224 = vld [vmem:[%s196 + $0xc8] sm:$0xff]
        %v225 = vld [vmem:[%s196 + $0xd0] sm:$0xff]
        %v226 = vld [vmem:[%s196 + $0xd8] sm:$0xff]
        %v227 = vld [vmem:[%s196 + $0xe0] sm:$0xff]
        %v228 = vld [vmem:[%s196 + $0xe8] sm:$0xff]
        %v229 = vld [vmem:[%s196 + $0xf0] sm:$0xff]
        %v230 = vld [vmem:[%s196 + $0xf8] sm:$0xff]
        %v231 = vld [vmem:[%s1] sm:$0x3]
        %v232 = vld [vmem:[%s2] sm:$0x3]
        %234 = vset.pattern.permute.xlu0 0
        %235 = vperm.xlu0 %234, %v199
        %v236 = vpop.permute.xlu0 %235
        %239 = vset.pattern.permute.xlu0 0
        %240 = vperm.xlu0 %239, %v200
        %v241 = vpop.permute.xlu0 %240
        %244 = vset.pattern.permute.xlu0 0
        %245 = vperm.xlu0 %244, %v201
        %v246 = vpop.permute.xlu0 %245
        %249 = vset.pattern.permute.xlu0 0
        %250 = vperm.xlu0 %249, %v202
        %v251 = vpop.permute.xlu0 %250
        %254 = vset.pattern.permute.xlu0 0
        %255 = vperm.xlu0 %254, %v203
        %v256 = vpop.permute.xlu0 %255
        %259 = vset.pattern.permute.xlu0 0
        %260 = vperm.xlu0 %259, %v204
        %v261 = vpop.permute.xlu0 %260
        %264 = vset.pattern.permute.xlu0 0
        %265 = vperm.xlu0 %264, %v205
        %v266 = vpop.permute.xlu0 %265
        %269 = vset.pattern.permute.xlu0 0
        %270 = vperm.xlu0 %269, %v206
        %v271 = vpop.permute.xlu0 %270
        %274 = vset.pattern.permute.xlu0 0
        %275 = vperm.xlu0 %274, %v207
        %v276 = vpop.permute.xlu0 %275
        %279 = vset.pattern.permute.xlu0 0
        %280 = vperm.xlu0 %279, %v208
        %v281 = vpop.permute.xlu0 %280
        %284 = vset.pattern.permute.xlu0 0
        %285 = vperm.xlu0 %284, %v209
        %v286 = vpop.permute.xlu0 %285
        %289 = vset.pattern.permute.xlu0 0
        %290 = vperm.xlu0 %289, %v210
        %v291 = vpop.permute.xlu0 %290
        %294 = vset.pattern.permute.xlu0 0
        %295 = vperm.xlu0 %294, %v211
        %v296 = vpop.permute.xlu0 %295
        %299 = vset.pattern.permute.xlu0 0
        %300 = vperm.xlu0 %299, %v212
        %v301 = vpop.permute.xlu0 %300
        %304 = vset.pattern.permute.xlu0 0
        %305 = vperm.xlu0 %304, %v213
        %v306 = vpop.permute.xlu0 %305
        %309 = vset.pattern.permute.xlu0 0
        %310 = vperm.xlu0 %309, %v214
        %v311 = vpop.permute.xlu0 %310
        %314 = vset.pattern.permute.xlu0 0
        %315 = vperm.xlu0 %314, %v215
        %v316 = vpop.permute.xlu0 %315
        %319 = vset.pattern.permute.xlu0 0
        %320 = vperm.xlu0 %319, %v216
        %v321 = vpop.permute.xlu0 %320
        %324 = vset.pattern.permute.xlu0 0
        %325 = vperm.xlu0 %324, %v217
        %v326 = vpop.permute.xlu0 %325
        %329 = vset.pattern.permute.xlu0 0
        %330 = vperm.xlu0 %329, %v218
        %v331 = vpop.permute.xlu0 %330
        %334 = vset.pattern.permute.xlu0 0
        %335 = vperm.xlu0 %334, %v219
        %v336 = vpop.permute.xlu0 %335
        %339 = vset.pattern.permute.xlu0 0
        %340 = vperm.xlu0 %339, %v220
        %v341 = vpop.permute.xlu0 %340
        %344 = vset.pattern.permute.xlu0 0
        %345 = vperm.xlu0 %344, %v221
        %v346 = vpop.permute.xlu0 %345
        %349 = vset.pattern.permute.xlu0 0
        %350 = vperm.xlu0 %349, %v222
        %v351 = vpop.permute.xlu0 %350
        %354 = vset.pattern.permute.xlu0 0
        %355 = vperm.xlu0 %354, %v223
        %v356 = vpop.permute.xlu0 %355
        %359 = vset.pattern.permute.xlu0 0
        %360 = vperm.xlu0 %359, %v224
        %v361 = vpop.permute.xlu0 %360
        %364 = vset.pattern.permute.xlu0 0
        %365 = vperm.xlu0 %364, %v225
        %v366 = vpop.permute.xlu0 %365
        %369 = vset.pattern.permute.xlu0 0
        %370 = vperm.xlu0 %369, %v226
        %v371 = vpop.permute.xlu0 %370
        %374 = vset.pattern.permute.xlu0 0
        %375 = vperm.xlu0 %374, %v227
        %v376 = vpop.permute.xlu0 %375
        %379 = vset.pattern.permute.xlu0 0
        %380 = vperm.xlu0 %379, %v228
        %v381 = vpop.permute.xlu0 %380
        %384 = vset.pattern.permute.xlu0 0
        %385 = vperm.xlu0 %384, %v229
        %v386 = vpop.permute.xlu0 %385
        %389 = vset.pattern.permute.xlu0 0
        %390 = vperm.xlu0 %389, %v230
        %v391 = vpop.permute.xlu0 %390
        %v394 = vlaneseq
        %v395 = vshrl.u32 %v394, 7
        %v396 = vsub.s32 0, %v395
        %v397 = vrot.slane %v231, %v396
        %v398 = vlaneseq
        %v399 = vshrl.u32 %v398, 7
        %v400 = vsub.s32 1, %v399
        %v401 = vrot.slane %v231, %v400
        %vm404 = vcmp.gt.f32.partialorder %v236, %v397
        %vm405 = vcmp.gt.f32.partialorder %v236, %v401
        %vm406 = vcmp.gt.f32.partialorder %v241, %v397
        %vm407 = vcmp.gt.f32.partialorder %v241, %v401
        %vm408 = vcmp.gt.f32.partialorder %v246, %v397
        %vm409 = vcmp.gt.f32.partialorder %v246, %v401
        %vm410 = vcmp.gt.f32.partialorder %v251, %v397
        %vm411 = vcmp.gt.f32.partialorder %v251, %v401
        %vm412 = vcmp.gt.f32.partialorder %v256, %v397
        %vm413 = vcmp.gt.f32.partialorder %v256, %v401
        %vm414 = vcmp.gt.f32.partialorder %v261, %v397
        %vm415 = vcmp.gt.f32.partialorder %v261, %v401
        %vm416 = vcmp.gt.f32.partialorder %v266, %v397
        %vm417 = vcmp.gt.f32.partialorder %v266, %v401
        %vm418 = vcmp.gt.f32.partialorder %v271, %v397
        %vm419 = vcmp.gt.f32.partialorder %v271, %v401
        %vm420 = vcmp.gt.f32.partialorder %v276, %v397
        %vm421 = vcmp.gt.f32.partialorder %v276, %v401
        %vm422 = vcmp.gt.f32.partialorder %v281, %v397
        %vm423 = vcmp.gt.f32.partialorder %v281, %v401
        %vm424 = vcmp.gt.f32.partialorder %v286, %v397
        %vm425 = vcmp.gt.f32.partialorder %v286, %v401
        %vm426 = vcmp.gt.f32.partialorder %v291, %v397
        %vm427 = vcmp.gt.f32.partialorder %v291, %v401
        %vm428 = vcmp.gt.f32.partialorder %v296, %v397
        %vm429 = vcmp.gt.f32.partialorder %v296, %v401
        %vm430 = vcmp.gt.f32.partialorder %v301, %v397
        %vm431 = vcmp.gt.f32.partialorder %v301, %v401
        %vm432 = vcmp.gt.f32.partialorder %v306, %v397
        %vm433 = vcmp.gt.f32.partialorder %v306, %v401
        %vm434 = vcmp.gt.f32.partialorder %v311, %v397
        %vm435 = vcmp.gt.f32.partialorder %v311, %v401
        %vm436 = vcmp.gt.f32.partialorder %v316, %v397
        %vm437 = vcmp.gt.f32.partialorder %v316, %v401
        %vm438 = vcmp.gt.f32.partialorder %v321, %v397
        %vm439 = vcmp.gt.f32.partialorder %v321, %v401
        %vm440 = vcmp.gt.f32.partialorder %v326, %v397
        %vm441 = vcmp.gt.f32.partialorder %v326, %v401
        %vm442 = vcmp.gt.f32.partialorder %v331, %v397
        %vm443 = vcmp.gt.f32.partialorder %v331, %v401
        %vm444 = vcmp.gt.f32.partialorder %v336, %v397
        %vm445 = vcmp.gt.f32.partialorder %v336, %v401
        %vm446 = vcmp.gt.f32.partialorder %v341, %v397
        %vm447 = vcmp.gt.f32.partialorder %v341, %v401
        %vm448 = vcmp.gt.f32.partialorder %v346, %v397
        %vm449 = vcmp.gt.f32.partialorder %v346, %v401
        %vm450 = vcmp.gt.f32.partialorder %v351, %v397
        %vm451 = vcmp.gt.f32.partialorder %v351, %v401
        %vm452 = vcmp.gt.f32.partialorder %v356, %v397
        %vm453 = vcmp.gt.f32.partialorder %v356, %v401
        %vm454 = vcmp.gt.f32.partialorder %v361, %v397
        %vm455 = vcmp.gt.f32.partialorder %v361, %v401
        %vm456 = vcmp.gt.f32.partialorder %v366, %v397
        %vm457 = vcmp.gt.f32.partialorder %v366, %v401
        %vm458 = vcmp.gt.f32.partialorder %v371, %v397
        %vm459 = vcmp.gt.f32.partialorder %v371, %v401
        %vm460 = vcmp.gt.f32.partialorder %v376, %v397
        %vm461 = vcmp.gt.f32.partialorder %v376, %v401
        %vm462 = vcmp.gt.f32.partialorder %v381, %v397
        %vm463 = vcmp.gt.f32.partialorder %v381, %v401
        %vm464 = vcmp.gt.f32.partialorder %v386, %v397
        %vm465 = vcmp.gt.f32.partialorder %v386, %v401
        %vm466 = vcmp.gt.f32.partialorder %v391, %v397
        %vm467 = vcmp.gt.f32.partialorder %v391, %v401
        %v469 = vlaneseq
        %v470 = vshrl.u32 %v469, 7
        %v471 = vsub.s32 0, %v470
        %v472 = vrot.slane %v232, %v471
        %v473 = vlaneseq
        %v474 = vshrl.u32 %v473, 7
        %v475 = vsub.s32 1, %v474
        %v476 = vrot.slane %v232, %v475
        %vm479 = vcmp.le.f32.partialorder %v236, %v472
        %vm480 = vcmp.le.f32.partialorder %v236, %v476
        %vm481 = vcmp.le.f32.partialorder %v241, %v472
        %vm482 = vcmp.le.f32.partialorder %v241, %v476
        %vm483 = vcmp.le.f32.partialorder %v246, %v472
        %vm484 = vcmp.le.f32.partialorder %v246, %v476
        %vm485 = vcmp.le.f32.partialorder %v251, %v472
        %vm486 = vcmp.le.f32.partialorder %v251, %v476
        %vm487 = vcmp.le.f32.partialorder %v256, %v472
        %vm488 = vcmp.le.f32.partialorder %v256, %v476
        %vm489 = vcmp.le.f32.partialorder %v261, %v472
        %vm490 = vcmp.le.f32.partialorder %v261, %v476
        %vm491 = vcmp.le.f32.partialorder %v266, %v472
        %vm492 = vcmp.le.f32.partialorder %v266, %v476
        %vm493 = vcmp.le.f32.partialorder %v271, %v472
        %vm494 = vcmp.le.f32.partialorder %v271, %v476
        %vm495 = vcmp.le.f32.partialorder %v276, %v472
        %vm496 = vcmp.le.f32.partialorder %v276, %v476
        %vm497 = vcmp.le.f32.partialorder %v281, %v472
        %vm498 = vcmp.le.f32.partialorder %v281, %v476
        %vm499 = vcmp.le.f32.partialorder %v286, %v472
        %vm500 = vcmp.le.f32.partialorder %v286, %v476
        %vm501 = vcmp.le.f32.partialorder %v291, %v472
        %vm502 = vcmp.le.f32.partialorder %v291, %v476
        %vm503 = vcmp.le.f32.partialorder %v296, %v472
        %vm504 = vcmp.le.f32.partialorder %v296, %v476
        %vm505 = vcmp.le.f32.partialorder %v301, %v472
        %vm506 = vcmp.le.f32.partialorder %v301, %v476
        %vm507 = vcmp.le.f32.partialorder %v306, %v472
        %vm508 = vcmp.le.f32.partialorder %v306, %v476
        %vm509 = vcmp.le.f32.partialorder %v311, %v472
        %vm510 = vcmp.le.f32.partialorder %v311, %v476
        %vm511 = vcmp.le.f32.partialorder %v316, %v472
        %vm512 = vcmp.le.f32.partialorder %v316, %v476
        %vm513 = vcmp.le.f32.partialorder %v321, %v472
        %vm514 = vcmp.le.f32.partialorder %v321, %v476
        %vm515 = vcmp.le.f32.partialorder %v326, %v472
        %vm516 = vcmp.le.f32.partialorder %v326, %v476
        %vm517 = vcmp.le.f32.partialorder %v331, %v472
        %vm518 = vcmp.le.f32.partialorder %v331, %v476
        %vm519 = vcmp.le.f32.partialorder %v336, %v472
        %vm520 = vcmp.le.f32.partialorder %v336, %v476
        %vm521 = vcmp.le.f32.partialorder %v341, %v472
        %vm522 = vcmp.le.f32.partialorder %v341, %v476
        %vm523 = vcmp.le.f32.partialorder %v346, %v472
        %vm524 = vcmp.le.f32.partialorder %v346, %v476
        %vm525 = vcmp.le.f32.partialorder %v351, %v472
        %vm526 = vcmp.le.f32.partialorder %v351, %v476
        %vm527 = vcmp.le.f32.partialorder %v356, %v472
        %vm528 = vcmp.le.f32.partialorder %v356, %v476
        %vm529 = vcmp.le.f32.partialorder %v361, %v472
        %vm530 = vcmp.le.f32.partialorder %v361, %v476
        %vm531 = vcmp.le.f32.partialorder %v366, %v472
        %vm532 = vcmp.le.f32.partialorder %v366, %v476
        %vm533 = vcmp.le.f32.partialorder %v371, %v472
        %vm534 = vcmp.le.f32.partialorder %v371, %v476
        %vm535 = vcmp.le.f32.partialorder %v376, %v472
        %vm536 = vcmp.le.f32.partialorder %v376, %v476
        %vm537 = vcmp.le.f32.partialorder %v381, %v472
        %vm538 = vcmp.le.f32.partialorder %v381, %v476
        %vm539 = vcmp.le.f32.partialorder %v386, %v472
        %vm540 = vcmp.le.f32.partialorder %v386, %v476
        %vm541 = vcmp.le.f32.partialorder %v391, %v472
        %vm542 = vcmp.le.f32.partialorder %v391, %v476
        %vm543 = vmand %vm404, %vm479
        %vm544 = vmand %vm405, %vm480
        %vm545 = vmand %vm406, %vm481
        %vm546 = vmand %vm407, %vm482
        %vm547 = vmand %vm408, %vm483
        %vm548 = vmand %vm409, %vm484
        %vm549 = vmand %vm410, %vm485
        %vm550 = vmand %vm411, %vm486
        %vm551 = vmand %vm412, %vm487
        %vm552 = vmand %vm413, %vm488
        %vm553 = vmand %vm414, %vm489
        %vm554 = vmand %vm415, %vm490
        %vm555 = vmand %vm416, %vm491
        %vm556 = vmand %vm417, %vm492
        %vm557 = vmand %vm418, %vm493
        %vm558 = vmand %vm419, %vm494
        %vm559 = vmand %vm420, %vm495
        %vm560 = vmand %vm421, %vm496
        %vm561 = vmand %vm422, %vm497
        %vm562 = vmand %vm423, %vm498
        %vm563 = vmand %vm424, %vm499
        %vm564 = vmand %vm425, %vm500
        %vm565 = vmand %vm426, %vm501
        %vm566 = vmand %vm427, %vm502
        %vm567 = vmand %vm428, %vm503
        %vm568 = vmand %vm429, %vm504
        %vm569 = vmand %vm430, %vm505
        %vm570 = vmand %vm431, %vm506
        %vm571 = vmand %vm432, %vm507
        %vm572 = vmand %vm433, %vm508
        %vm573 = vmand %vm434, %vm509
        %vm574 = vmand %vm435, %vm510
        %vm575 = vmand %vm436, %vm511
        %vm576 = vmand %vm437, %vm512
        %vm577 = vmand %vm438, %vm513
        %vm578 = vmand %vm439, %vm514
        %vm579 = vmand %vm440, %vm515
        %vm580 = vmand %vm441, %vm516
        %vm581 = vmand %vm442, %vm517
        %vm582 = vmand %vm443, %vm518
        %vm583 = vmand %vm444, %vm519
        %vm584 = vmand %vm445, %vm520
        %vm585 = vmand %vm446, %vm521
        %vm586 = vmand %vm447, %vm522
        %vm587 = vmand %vm448, %vm523
        %vm588 = vmand %vm449, %vm524
        %vm589 = vmand %vm450, %vm525
        %vm590 = vmand %vm451, %vm526
        %vm591 = vmand %vm452, %vm527
        %vm592 = vmand %vm453, %vm528
        %vm593 = vmand %vm454, %vm529
        %vm594 = vmand %vm455, %vm530
        %vm595 = vmand %vm456, %vm531
        %vm596 = vmand %vm457, %vm532
        %vm597 = vmand %vm458, %vm533
        %vm598 = vmand %vm459, %vm534
        %vm599 = vmand %vm460, %vm535
        %vm600 = vmand %vm461, %vm536
        %vm601 = vmand %vm462, %vm537
        %vm602 = vmand %vm463, %vm538
        %vm603 = vmand %vm464, %vm539
        %vm604 = vmand %vm465, %vm540
        %vm605 = vmand %vm466, %vm541
        %vm606 = vmand %vm467, %vm542
        %v607 = vsel %vm543, 1, 0
        %v608 = vsel %vm544, 1, 0
        %v609 = vsel %vm545, 1, 0
        %v610 = vsel %vm546, 1, 0
        %v611 = vsel %vm547, 1, 0
        %v612 = vsel %vm548, 1, 0
        %v613 = vsel %vm549, 1, 0
        %v614 = vsel %vm550, 1, 0
        %v615 = vsel %vm551, 1, 0
        %v616 = vsel %vm552, 1, 0
        %v617 = vsel %vm553, 1, 0
        %v618 = vsel %vm554, 1, 0
        %v619 = vsel %vm555, 1, 0
        %v620 = vsel %vm556, 1, 0
        %v621 = vsel %vm557, 1, 0
        %v622 = vsel %vm558, 1, 0
        %v623 = vsel %vm559, 1, 0
        %v624 = vsel %vm560, 1, 0
        %v625 = vsel %vm561, 1, 0
        %v626 = vsel %vm562, 1, 0
        %v627 = vsel %vm563, 1, 0
        %v628 = vsel %vm564, 1, 0
        %v629 = vsel %vm565, 1, 0
        %v630 = vsel %vm566, 1, 0
        %v631 = vsel %vm567, 1, 0
        %v632 = vsel %vm568, 1, 0
        %v633 = vsel %vm569, 1, 0
        %v634 = vsel %vm570, 1, 0
        %v635 = vsel %vm571, 1, 0
        %v636 = vsel %vm572, 1, 0
        %v637 = vsel %vm573, 1, 0
        %v638 = vsel %vm574, 1, 0
        %v639 = vsel %vm575, 1, 0
        %v640 = vsel %vm576, 1, 0
        %v641 = vsel %vm577, 1, 0
        %v642 = vsel %vm578, 1, 0
        %v643 = vsel %vm579, 1, 0
        %v644 = vsel %vm580, 1, 0
        %v645 = vsel %vm581, 1, 0
        %v646 = vsel %vm582, 1, 0
        %v647 = vsel %vm583, 1, 0
        %v648 = vsel %vm584, 1, 0
        %v649 = vsel %vm585, 1, 0
        %v650 = vsel %vm586, 1, 0
        %v651 = vsel %vm587, 1, 0
        %v652 = vsel %vm588, 1, 0
        %v653 = vsel %vm589, 1, 0
        %v654 = vsel %vm590, 1, 0
        %v655 = vsel %vm591, 1, 0
        %v656 = vsel %vm592, 1, 0
        %v657 = vsel %vm593, 1, 0
        %v658 = vsel %vm594, 1, 0
        %v659 = vsel %vm595, 1, 0
        %v660 = vsel %vm596, 1, 0
        %v661 = vsel %vm597, 1, 0
        %v662 = vsel %vm598, 1, 0
        %v663 = vsel %vm599, 1, 0
        %v664 = vsel %vm600, 1, 0
        %v665 = vsel %vm601, 1, 0
        %v666 = vsel %vm602, 1, 0
        %v667 = vsel %vm603, 1, 0
        %v668 = vsel %vm604, 1, 0
        %v669 = vsel %vm605, 1, 0
        %v670 = vsel %vm606, 1, 0
        %v671 = vcvt.s32.f32 %v607
        %v672 = vcvt.s32.f32 %v608
        %v673 = vcvt.s32.f32 %v609
        %v674 = vcvt.s32.f32 %v610
        %v675 = vcvt.s32.f32 %v611
        %v676 = vcvt.s32.f32 %v612
        %v677 = vcvt.s32.f32 %v613
        %v678 = vcvt.s32.f32 %v614
        %v679 = vcvt.s32.f32 %v615
        %v680 = vcvt.s32.f32 %v616
        %v681 = vcvt.s32.f32 %v617
        %v682 = vcvt.s32.f32 %v618
        %v683 = vcvt.s32.f32 %v619
        %v684 = vcvt.s32.f32 %v620
        %v685 = vcvt.s32.f32 %v621
        %v686 = vcvt.s32.f32 %v622
        %v687 = vcvt.s32.f32 %v623
        %v688 = vcvt.s32.f32 %v624
        %v689 = vcvt.s32.f32 %v625
        %v690 = vcvt.s32.f32 %v626
        %v691 = vcvt.s32.f32 %v627
        %v692 = vcvt.s32.f32 %v628
        %v693 = vcvt.s32.f32 %v629
        %v694 = vcvt.s32.f32 %v630
        %v695 = vcvt.s32.f32 %v631
        %v696 = vcvt.s32.f32 %v632
        %v697 = vcvt.s32.f32 %v633
        %v698 = vcvt.s32.f32 %v634
        %v699 = vcvt.s32.f32 %v635
        %v700 = vcvt.s32.f32 %v636
        %v701 = vcvt.s32.f32 %v637
        %v702 = vcvt.s32.f32 %v638
        %v703 = vcvt.s32.f32 %v639
        %v704 = vcvt.s32.f32 %v640
        %v705 = vcvt.s32.f32 %v641
        %v706 = vcvt.s32.f32 %v642
        %v707 = vcvt.s32.f32 %v643
        %v708 = vcvt.s32.f32 %v644
        %v709 = vcvt.s32.f32 %v645
        %v710 = vcvt.s32.f32 %v646
        %v711 = vcvt.s32.f32 %v647
        %v712 = vcvt.s32.f32 %v648
        %v713 = vcvt.s32.f32 %v649
        %v714 = vcvt.s32.f32 %v650
        %v715 = vcvt.s32.f32 %v651
        %v716 = vcvt.s32.f32 %v652
        %v717 = vcvt.s32.f32 %v653
        %v718 = vcvt.s32.f32 %v654
        %v719 = vcvt.s32.f32 %v655
        %v720 = vcvt.s32.f32 %v656
        %v721 = vcvt.s32.f32 %v657
        %v722 = vcvt.s32.f32 %v658
        %v723 = vcvt.s32.f32 %v659
        %v724 = vcvt.s32.f32 %v660
        %v725 = vcvt.s32.f32 %v661
        %v726 = vcvt.s32.f32 %v662
        %v727 = vcvt.s32.f32 %v663
        %v728 = vcvt.s32.f32 %v664
        %v729 = vcvt.s32.f32 %v665
        %v730 = vcvt.s32.f32 %v666
        %v731 = vcvt.s32.f32 %v667
        %v732 = vcvt.s32.f32 %v668
        %v733 = vcvt.s32.f32 %v669
        %v734 = vcvt.s32.f32 %v670
        %v735 = vld [vmem:[%s3] sm:$0xff]
        %v736 = vld [vmem:[%s3 + $0x8] sm:$0xff]
        %v737 = vld [vmem:[%s3 + $0x10] sm:$0xff]
        %v738 = vld [vmem:[%s3 + $0x18] sm:$0xff]
        %v739 = vld [vmem:[%s3 + $0x20] sm:$0xff]
        %v740 = vld [vmem:[%s3 + $0x28] sm:$0xff]
        %v741 = vld [vmem:[%s3 + $0x30] sm:$0xff]
        %v742 = vld [vmem:[%s3 + $0x38] sm:$0xff]
        %v743 = vld [vmem:[%s3 + $0x40] sm:$0xff]
        %v744 = vld [vmem:[%s3 + $0x48] sm:$0xff]
        %v745 = vld [vmem:[%s3 + $0x50] sm:$0xff]
        %v746 = vld [vmem:[%s3 + $0x58] sm:$0xff]
        %v747 = vld [vmem:[%s3 + $0x60] sm:$0xff]
        %v748 = vld [vmem:[%s3 + $0x68] sm:$0xff]
        %v749 = vld [vmem:[%s3 + $0x70] sm:$0xff]
        %v750 = vld [vmem:[%s3 + $0x78] sm:$0xff]
        %v751 = vld [vmem:[%s3 + $0x80] sm:$0xff]
        %v752 = vld [vmem:[%s3 + $0x88] sm:$0xff]
        %v753 = vld [vmem:[%s3 + $0x90] sm:$0xff]
        %v754 = vld [vmem:[%s3 + $0x98] sm:$0xff]
        %v755 = vld [vmem:[%s3 + $0xa0] sm:$0xff]
        %v756 = vld [vmem:[%s3 + $0xa8] sm:$0xff]
        %v757 = vld [vmem:[%s3 + $0xb0] sm:$0xff]
        %v758 = vld [vmem:[%s3 + $0xb8] sm:$0xff]
        %v759 = vld [vmem:[%s3 + $0xc0] sm:$0xff]
        %v760 = vld [vmem:[%s3 + $0xc8] sm:$0xff]
        %v761 = vld [vmem:[%s3 + $0xd0] sm:$0xff]
        %v762 = vld [vmem:[%s3 + $0xd8] sm:$0xff]
        %v763 = vld [vmem:[%s3 + $0xe0] sm:$0xff]
        %v764 = vld [vmem:[%s3 + $0xe8] sm:$0xff]
        %v765 = vld [vmem:[%s3 + $0xf0] sm:$0xff]
        %v766 = vld [vmem:[%s3 + $0xf8] sm:$0xff]
        %767 = vmatprep.subr.mxu0 0.0
        %768 = vmatpush1.msra.mxu0 %v750
        %769 = vmatprep.subr.mxu0 0.0
        %770 = vmatpush1.msra.mxu0 %v749
        %771 = vmatprep.subr.mxu0 0.0
        %772 = vmatpush1.msra.mxu0 %v748
        %773 = vmatprep.subr.mxu0 0.0
        %774 = vmatpush1.msra.mxu0 %v747
        %775 = vmatprep.subr.mxu0 0.0
        %776 = vmatpush1.msra.mxu0 %v746
        %777 = vmatprep.subr.mxu0 0.0
        %778 = vmatpush1.msra.mxu0 %v745
        %779 = vmatprep.subr.mxu0 0.0
        %780 = vmatpush1.msra.mxu0 %v744
        %781 = vmatprep.subr.mxu0 0.0
        %782 = vmatpush1.msra.mxu0 %v743
        %783 = vmatprep.subr.mxu0 0.0
        %784 = vmatpush1.msra.mxu0 %v742
        %785 = vmatprep.subr.mxu0 0.0
        %786 = vmatpush1.msra.mxu0 %v741
        %787 = vmatprep.subr.mxu0 0.0
        %788 = vmatpush1.msra.mxu0 %v740
        %789 = vmatprep.subr.mxu0 0.0
        %790 = vmatpush1.msra.mxu0 %v739
        %791 = vmatprep.subr.mxu0 0.0
        %792 = vmatpush1.msra.mxu0 %v738
        %793 = vmatprep.subr.mxu0 0.0
        %794 = vmatpush1.msra.mxu0 %v737
        %795 = vmatprep.subr.mxu0 0.0
        %796 = vmatpush1.msra.mxu0 %v736
        %797 = vmatprep.subr.mxu0 0.0
        %798 = vmatpush1.msra.mxu0 %v735
        %799 = vmatprep.subr.mxu0 0.0
        %800 = vmatpush2.msra.mxu0 %v766
        %801 = vmatprep.subr.mxu0 0.0
        %802 = vmatpush2.msra.mxu0 %v765
        %803 = vmatprep.subr.mxu0 0.0
        %804 = vmatpush2.msra.mxu0 %v764
        %805 = vmatprep.subr.mxu0 0.0
        %806 = vmatpush2.msra.mxu0 %v763
        %807 = vmatprep.subr.mxu0 0.0
        %808 = vmatpush2.msra.mxu0 %v762
        %809 = vmatprep.subr.mxu0 0.0
        %810 = vmatpush2.msra.mxu0 %v761
        %811 = vmatprep.subr.mxu0 0.0
        %812 = vmatpush2.msra.mxu0 %v760
        %813 = vmatprep.subr.mxu0 0.0
        %814 = vmatpush2.msra.mxu0 %v759
        %815 = vmatprep.subr.mxu0 0.0
        %816 = vmatpush2.msra.mxu0 %v758
        %817 = vmatprep.subr.mxu0 0.0
        %818 = vmatpush2.msra.mxu0 %v757
        %819 = vmatprep.subr.mxu0 0.0
        %820 = vmatpush2.msra.mxu0 %v756
        %821 = vmatprep.subr.mxu0 0.0
        %822 = vmatpush2.msra.mxu0 %v755
        %823 = vmatprep.subr.mxu0 0.0
        %824 = vmatpush2.msra.mxu0 %v754
        %825 = vmatprep.subr.mxu0 0.0
        %826 = vmatpush2.msra.mxu0 %v753
        %827 = vmatprep.subr.mxu0 0.0
        %828 = vmatpush2.msra.mxu0 %v752
        %829 = vmatprep.subr.mxu0 0.0
        %830 = vmatpush2.msra.mxu0 %v751
        %831 = vmatprep.mubr.f32.mxu0 %v672
        %832 = vmatmul.mubr.f32.gmra.mxu0 %v671
        %v833 = vpop.f32.mrf.mxu0
        %v834 = vadd.f32 0.0, %v833
        %v835 = vpop.f32.mrf.mxu0
        %836 = vmatprep.mubr.f32.mxu0 %v674
        %837 = vmatmul.mubr.f32.gmra.mxu0 %v673
        %v838 = vpop.f32.mrf.mxu0
        %v839 = vadd.f32 0.0, %v838
        %v840 = vpop.f32.mrf.mxu0
        %841 = vmatprep.mubr.f32.mxu0 %v676
        %842 = vmatmul.mubr.f32.gmra.mxu0 %v675
        %v843 = vpop.f32.mrf.mxu0
        %v844 = vadd.f32 0.0, %v843
        %v845 = vpop.f32.mrf.mxu0
        %846 = vmatprep.mubr.f32.mxu0 %v678
        %847 = vmatmul.mubr.f32.gmra.mxu0 %v677
        %v848 = vpop.f32.mrf.mxu0
        %v849 = vadd.f32 0.0, %v848
        %v850 = vpop.f32.mrf.mxu0
        %851 = vmatprep.mubr.f32.mxu0 %v680
        %852 = vmatmul.mubr.f32.gmra.mxu0 %v679
        %v853 = vpop.f32.mrf.mxu0
        %v854 = vadd.f32 0.0, %v853
        %v855 = vpop.f32.mrf.mxu0
        %856 = vmatprep.mubr.f32.mxu0 %v682
        %857 = vmatmul.mubr.f32.gmra.mxu0 %v681
        %v858 = vpop.f32.mrf.mxu0
        %v859 = vadd.f32 0.0, %v858
        %v860 = vpop.f32.mrf.mxu0
        %861 = vmatprep.mubr.f32.mxu0 %v684
        %862 = vmatmul.mubr.f32.gmra.mxu0 %v683
        %v863 = vpop.f32.mrf.mxu0
        %v864 = vadd.f32 0.0, %v863
        %v865 = vpop.f32.mrf.mxu0
        %866 = vmatprep.mubr.f32.mxu0 %v686
        %867 = vmatmul.mubr.f32.gmra.mxu0 %v685
        %v868 = vpop.f32.mrf.mxu0
        %v869 = vadd.f32 0.0, %v868
        %v870 = vpop.f32.mrf.mxu0
        %871 = vmatprep.mubr.f32.mxu0 %v688
        %872 = vmatmul.mubr.f32.gmra.mxu0 %v687
        %v873 = vpop.f32.mrf.mxu0
        %v874 = vadd.f32 0.0, %v873
        %v875 = vpop.f32.mrf.mxu0
        %876 = vmatprep.mubr.f32.mxu0 %v690
        %877 = vmatmul.mubr.f32.gmra.mxu0 %v689
        %v878 = vpop.f32.mrf.mxu0
        %v879 = vadd.f32 0.0, %v878
        %v880 = vpop.f32.mrf.mxu0
        %881 = vmatprep.mubr.f32.mxu0 %v692
        %882 = vmatmul.mubr.f32.gmra.mxu0 %v691
        %v883 = vpop.f32.mrf.mxu0
        %v884 = vadd.f32 0.0, %v883
        %v885 = vpop.f32.mrf.mxu0
        %886 = vmatprep.mubr.f32.mxu0 %v694
        %887 = vmatmul.mubr.f32.gmra.mxu0 %v693
        %v888 = vpop.f32.mrf.mxu0
        %v889 = vadd.f32 0.0, %v888
        %v890 = vpop.f32.mrf.mxu0
        %891 = vmatprep.mubr.f32.mxu0 %v696
        %892 = vmatmul.mubr.f32.gmra.mxu0 %v695
        %v893 = vpop.f32.mrf.mxu0
        %v894 = vadd.f32 0.0, %v893
        %v895 = vpop.f32.mrf.mxu0
        %896 = vmatprep.mubr.f32.mxu0 %v698
        %897 = vmatmul.mubr.f32.gmra.mxu0 %v697
        %v898 = vpop.f32.mrf.mxu0
        %v899 = vadd.f32 0.0, %v898
        %v900 = vpop.f32.mrf.mxu0
        %901 = vmatprep.mubr.f32.mxu0 %v700
        %902 = vmatmul.mubr.f32.gmra.mxu0 %v699
        %v903 = vpop.f32.mrf.mxu0
        %v904 = vadd.f32 0.0, %v903
        %v905 = vpop.f32.mrf.mxu0
        %906 = vmatprep.mubr.f32.mxu0 %v702
        %907 = vmatmul.mubr.f32.gmra.mxu0 %v701
        %v908 = vpop.f32.mrf.mxu0
        %v909 = vadd.f32 0.0, %v908
        %v910 = vpop.f32.mrf.mxu0
        %911 = vmatprep.mubr.f32.mxu0 %v704
        %912 = vmatmul.mubr.f32.gmra.mxu0 %v703
        %v913 = vpop.f32.mrf.mxu0
        %v914 = vadd.f32 0.0, %v913
        %v915 = vpop.f32.mrf.mxu0
        %916 = vmatprep.mubr.f32.mxu0 %v706
        %917 = vmatmul.mubr.f32.gmra.mxu0 %v705
        %v918 = vpop.f32.mrf.mxu0
        %v919 = vadd.f32 0.0, %v918
        %v920 = vpop.f32.mrf.mxu0
        %921 = vmatprep.mubr.f32.mxu0 %v708
        %922 = vmatmul.mubr.f32.gmra.mxu0 %v707
        %v923 = vpop.f32.mrf.mxu0
        %v924 = vadd.f32 0.0, %v923
        %v925 = vpop.f32.mrf.mxu0
        %926 = vmatprep.mubr.f32.mxu0 %v710
        %927 = vmatmul.mubr.f32.gmra.mxu0 %v709
        %v928 = vpop.f32.mrf.mxu0
        %v929 = vadd.f32 0.0, %v928
        %v930 = vpop.f32.mrf.mxu0
        %931 = vmatprep.mubr.f32.mxu0 %v712
        %932 = vmatmul.mubr.f32.gmra.mxu0 %v711
        %v933 = vpop.f32.mrf.mxu0
        %v934 = vadd.f32 0.0, %v933
        %v935 = vpop.f32.mrf.mxu0
        %936 = vmatprep.mubr.f32.mxu0 %v714
        %937 = vmatmul.mubr.f32.gmra.mxu0 %v713
        %v938 = vpop.f32.mrf.mxu0
        %v939 = vadd.f32 0.0, %v938
        %v940 = vpop.f32.mrf.mxu0
        %941 = vmatprep.mubr.f32.mxu0 %v716
        %942 = vmatmul.mubr.f32.gmra.mxu0 %v715
        %v943 = vpop.f32.mrf.mxu0
        %v944 = vadd.f32 0.0, %v943
        %v945 = vpop.f32.mrf.mxu0
        %946 = vmatprep.mubr.f32.mxu0 %v718
        %947 = vmatmul.mubr.f32.gmra.mxu0 %v717
        %v948 = vpop.f32.mrf.mxu0
        %v949 = vadd.f32 0.0, %v948
        %v950 = vpop.f32.mrf.mxu0
        %951 = vmatprep.mubr.f32.mxu0 %v720
        %952 = vmatmul.mubr.f32.gmra.mxu0 %v719
        %v953 = vpop.f32.mrf.mxu0
        %v954 = vadd.f32 0.0, %v953
        %v955 = vpop.f32.mrf.mxu0
        %956 = vmatprep.mubr.f32.mxu0 %v722
        %957 = vmatmul.mubr.f32.gmra.mxu0 %v721
        %v958 = vpop.f32.mrf.mxu0
        %v959 = vadd.f32 0.0, %v958
        %v960 = vpop.f32.mrf.mxu0
        %961 = vmatprep.mubr.f32.mxu0 %v724
        %962 = vmatmul.mubr.f32.gmra.mxu0 %v723
        %v963 = vpop.f32.mrf.mxu0
        %v964 = vadd.f32 0.0, %v963
        %v965 = vpop.f32.mrf.mxu0
        %966 = vmatprep.mubr.f32.mxu0 %v726
        %967 = vmatmul.mubr.f32.gmra.mxu0 %v725
        %v968 = vpop.f32.mrf.mxu0
        %v969 = vadd.f32 0.0, %v968
        %v970 = vpop.f32.mrf.mxu0
        %971 = vmatprep.mubr.f32.mxu0 %v728
        %972 = vmatmul.mubr.f32.gmra.mxu0 %v727
        %v973 = vpop.f32.mrf.mxu0
        %v974 = vadd.f32 0.0, %v973
        %v975 = vpop.f32.mrf.mxu0
        %976 = vmatprep.mubr.f32.mxu0 %v730
        %977 = vmatmul.mubr.f32.gmra.mxu0 %v729
        %v978 = vpop.f32.mrf.mxu0
        %v979 = vadd.f32 0.0, %v978
        %v980 = vpop.f32.mrf.mxu0
        %981 = vmatprep.mubr.f32.mxu0 %v732
        %982 = vmatmul.mubr.f32.gmra.mxu0 %v731
        %v983 = vpop.f32.mrf.mxu0
        %v984 = vadd.f32 0.0, %v983
        %v985 = vpop.f32.mrf.mxu0
        %986 = vmatprep.mubr.f32.mxu0 %v734
        %987 = vmatmul.mubr.f32.gmra.mxu0 %v733
        %v988 = vpop.f32.mrf.mxu0
        %v989 = vadd.f32 0.0, %v988
        %v990 = vpop.f32.mrf.mxu0
        %991 = vdwg.mxu0
        %992 = vst [vmem:[%s191] sm:$0xff] %v834
        %993 = vst [vmem:[%s191 + $0x8] sm:$0xff] %v839
        %994 = vst [vmem:[%s191 + $0x10] sm:$0xff] %v844
        %995 = vst [vmem:[%s191 + $0x18] sm:$0xff] %v849
        %996 = vst [vmem:[%s191 + $0x20] sm:$0xff] %v854
        %997 = vst [vmem:[%s191 + $0x28] sm:$0xff] %v859
        %998 = vst [vmem:[%s191 + $0x30] sm:$0xff] %v864
        %999 = vst [vmem:[%s191 + $0x38] sm:$0xff] %v869
        %1000 = vst [vmem:[%s191 + $0x40] sm:$0xff] %v874
        %1001 = vst [vmem:[%s191 + $0x48] sm:$0xff] %v879
        %1002 = vst [vmem:[%s191 + $0x50] sm:$0xff] %v884
        %1003 = vst [vmem:[%s191 + $0x58] sm:$0xff] %v889
        %1004 = vst [vmem:[%s191 + $0x60] sm:$0xff] %v894
        %1005 = vst [vmem:[%s191 + $0x68] sm:$0xff] %v899
        %1006 = vst [vmem:[%s191 + $0x70] sm:$0xff] %v904
        %1007 = vst [vmem:[%s191 + $0x78] sm:$0xff] %v909
        %1008 = vst [vmem:[%s191 + $0x80] sm:$0xff] %v914
        %1009 = vst [vmem:[%s191 + $0x88] sm:$0xff] %v919
        %1010 = vst [vmem:[%s191 + $0x90] sm:$0xff] %v924
        %1011 = vst [vmem:[%s191 + $0x98] sm:$0xff] %v929
        %1012 = vst [vmem:[%s191 + $0xa0] sm:$0xff] %v934
        %1013 = vst [vmem:[%s191 + $0xa8] sm:$0xff] %v939
        %1014 = vst [vmem:[%s191 + $0xb0] sm:$0xff] %v944
        %1015 = vst [vmem:[%s191 + $0xb8] sm:$0xff] %v949
        %1016 = vst [vmem:[%s191 + $0xc0] sm:$0xff] %v954
        %1017 = vst [vmem:[%s191 + $0xc8] sm:$0xff] %v959
        %1018 = vst [vmem:[%s191 + $0xd0] sm:$0xff] %v964
        %1019 = vst [vmem:[%s191 + $0xd8] sm:$0xff] %v969
        %1020 = vst [vmem:[%s191 + $0xe0] sm:$0xff] %v974
        %1021 = vst [vmem:[%s191 + $0xe8] sm:$0xff] %v979
        %1022 = vst [vmem:[%s191 + $0xf0] sm:$0xff] %v984
        %1023 = vst [vmem:[%s191 + $0xf8] sm:$0xff] %v989
        %s1024 = sand.u32 %s115, 1
        %s1025 = scalar_lea.sflag [#allocation3], %s1024
        %s1026 = sand.u32 %s115, 1
        %s1027 = smul.addr %s1026, 256
        %s1028 = scalar_lea.vmem [#allocation2], %s1027
        // Predicated region
        $region37: #{tpu_custom_call.1} parent=35 // pred_check
          %p1029 = pneg %p125
        $region38: #{tpu_custom_call.1} parent=35 // pred_check_branch
          %1031 = sbr.rel (%p1029) target = $region40
        $region39: #{tpu_custom_call.1} parent=35 // pred_region
          %s1032 = smul.u32 32, %s18
          %s1034 = ssub.s32 4096, 4096
          %1035 = vsyncadd %s1025, %s1034
          %s1036 = smul.addr %s1032, 128
          %s1037 = scalar_lea.hbm %s4, %s1036
          %s1038 = sshll.u32 %s1028, 4
          %s1039 = int_to_ptr.vmem [resolvable:$true] %s1038
          %1044 = dma.vmem_to_hbm [thread:$0]  %s1039, 4096, %s1037, %s1025, 128, 128, 8
        $region40: #{tpu_custom_call.1} parent=35 // pred_fallthru
          _
      $region36: #{tpu_custom_call.1} parent=5 // pred_fallthru
        _
      %p1045 = scmp.le.s32.totalorder 2, %s13
      // Predicated region
      $region41: #{tpu_custom_call.1} parent=5 // pred_check
        %p1046 = pneg %p1045
      $region42: #{tpu_custom_call.1} parent=5 // pred_check_branch
        %1048 = sbr.rel (%p1046) target = $region44
      $region43: #{tpu_custom_call.1} parent=5 // pred_region
        %s1049 = ssub.s32 %s13, 2
        // Predicated region
        $region45: #{tpu_custom_call.1} parent=43 // pred_check
          %p1050 = pneg %p131
        $region46: #{tpu_custom_call.1} parent=43 // pred_check_branch
          %1052 = sbr.rel (%p1050) target = $region48
        $region47: #{tpu_custom_call.1} parent=43 // pred_region
          %s1053 = sand.u32 %s116, 1
          %s1054 = scalar_lea.sflag [#allocation3], %s1053
          %s1055 = sand.u32 %s116, 1
          %s1056 = smul.addr %s1055, 256
          %s1057 = scalar_lea.vmem [#allocation2], %s1056
          %1058 = dma.done %s1054, 4096
        $region48: #{tpu_custom_call.1} parent=43 // pred_fallthru
          _
      $region44: #{tpu_custom_call.1} parent=5 // pred_fallthru
        _
    $region6: #{tpu_custom_call.1} parent=1 // loop_footer
      %s17 = sadd.s32 1, %s13
    $region7: #{tpu_custom_call.1} parent=1 // loop_footer_branch
      %12 = sbr.rel target = $region3
    $region8: #{tpu_custom_call.1} parent=1 // loop_exit
      _
    %1059 = vsyncpa [#allocation3], 1
    %s1060 = scalar_lea.sflag [#allocation3], 1
    %1061 = vsyncpa %s1060, 1

</llo_original>
